<compile_context>
chip_gen: v7x
topology: tpu7x:2x2x1
jax: 0.10.0
libtpu: 0.0.40
codegen_flags: <defaults>
</compile_context>

<pallas_src>
import functools

import jax
import jax.numpy as jnp
from jax.experimental import pallas as pl
from jax.experimental.pallas import tpu as pltpu


def _round_up(x, m):
    return ((x + m - 1) // m) * m


def _ce_kernel(logits_ref, targets_ref, nll_ref, m_ref, l_ref, t_ref, *,
               n_valid, block_n, block_c, c_rem):
    """Online-logsumexp cross entropy over one (row tile, class tile) block."""
    i = pl.program_id(0)           # row-tile index   ("parallel")
    j = pl.program_id(1)           # class-tile index ("arbitrary", innermost)
    nj = pl.num_programs(1)

    @pl.when(j == 0)
    def _init():
        m_ref[...] = jnp.full_like(m_ref, -jnp.inf)
        l_ref[...] = jnp.zeros_like(l_ref)
        t_ref[...] = jnp.zeros_like(t_ref)

    def update(mask_classes):
        logits = logits_ref[...]                          # (tn, tc), input dtype
        tn, tc = logits.shape
        col = jax.lax.broadcasted_iota(jnp.int32, (tn, tc), 1)
        if mask_classes:
            # Only traced when C % tc != 0 and only executed on the last class
            # tile: neutralize the out-of-bounds lanes of this block.
            logits = jnp.where(col < c_rem, logits, jnp.finfo(logits.dtype).min)

        # Target-logit gather via lane-iota compare (VPU only).  The class
        # offset is applied on the (tn,1) target side, not per element.
        tgt_local = targets_ref[...] - j * block_c        # (tn, 1) int32
        picked = jnp.where(col == tgt_local, logits, 0)
        t_ref[...] += jnp.sum(picked, axis=-1, keepdims=True).astype(jnp.float32)

        # Online (running) logsumexp.  Max runs in the input dtype; the f32
        # upcast happens only at the exp (bf16 exp on v6e/v7x would halve EUP
        # work but is kept f32 for v5e portability).
        m_prev = m_ref[...]
        m_tile = jnp.max(logits, axis=-1, keepdims=True).astype(jnp.float32)
        m_new = jnp.maximum(m_prev, m_tile)
        p = jnp.exp((logits - m_new).astype(jnp.float32))
        l_ref[...] = (l_ref[...] * jnp.exp(m_prev - m_new)
                      + jnp.sum(p, axis=-1, keepdims=True))
        m_ref[...] = m_new

    if c_rem:
        last = nj - 1
        pl.when(j == last)(lambda: update(True))
        pl.when(j != last)(lambda: update(False))
    else:
        update(False)

    @pl.when(j == nj - 1)
    def _finalize():
        lse = m_ref[...] + jnp.log(l_ref[...])
        nll = lse - t_ref[...]                                        # (tn, 1)
        row = jax.lax.broadcasted_iota(jnp.int32, nll.shape, 0) + i * block_n
        nll_ref[...] = jnp.where(row < n_valid, nll, 0.0)             # edge rows -> 0


def _auto_tiles(dtype):
    """~4 MiB logits blocks on v7x (64 MiB VMEM/TC), ~8 MiB on v5e/v6e (128 MiB)."""
    itemsize = jnp.dtype(dtype).itemsize
    try:
        is_v7 = "v7" in jax.devices()[0].device_kind.lower()
    except Exception:
        is_v7 = False
    block_bytes = (4 if is_v7 else 8) * 1024 * 1024
    tile_n = 512
    tile_c = max(128, (block_bytes // (tile_n * itemsize)) // 128 * 128)
    vmem_limit = (48 if is_v7 else 64) * 1024 * 1024
    return tile_n, tile_c, vmem_limit


def softmax_loss_second_part(logits, targets, *, tile_n=None, tile_c=None,
                             vmem_limit_bytes=None):
    """CrossEntropyLoss (reduction='mean') over [N, C] logits and [N] int targets."""
    n, c = logits.shape
    targets_2d = targets.astype(jnp.int32).reshape(n, 1)

    auto_n, auto_c, auto_vmem = _auto_tiles(logits.dtype)
    tile_n = auto_n if tile_n is None else tile_n
    tile_c = auto_c if tile_c is None else tile_c
    vmem_limit_bytes = auto_vmem if vmem_limit_bytes is None else vmem_limit_bytes

    # Row tile: multiple of 16 (covers f32 and bf16 sublane packing); kept small
    # enough that there are >= 2 row tiles whenever N >= 32, so the "parallel"
    # row axis can shard across v7x's two TensorCores.
    tile_n_eff = max(16, (tile_n // 16) * 16)
    tn = min(tile_n_eff, _round_up(pl.cdiv(n, 2), 16))
    num_row_tiles = pl.cdiv(n, tn)

    # Class tile: full C if it fits, else a lane (128) multiple; the remainder
    # (C % tc) is masked in-kernel on the last class tile -- no jnp.pad copy.
    if c <= tile_c:
        tc = c
    else:
        tc = max(128, (tile_c // 128) * 128)
    num_cls_tiles = pl.cdiv(c, tc)
    c_rem = c % tc

    kernel = functools.partial(_ce_kernel, n_valid=n, block_n=tn,
                               block_c=tc, c_rem=c_rem)

    itemsize = jnp.dtype(logits.dtype).itemsize
    cost = pl.CostEstimate(flops=5 * n * c,
                           transcendentals=n * c,
                           bytes_accessed=n * c * itemsize + 8 * n)

    per_row_nll = pl.pallas_call(
        kernel,
        out_shape=jax.ShapeDtypeStruct((num_row_tiles * tn, 1), jnp.float32),
        grid_spec=pltpu.PrefetchScalarGridSpec(
            num_scalar_prefetch=0,
            grid=(num_row_tiles, num_cls_tiles),
            in_specs=[
                pl.BlockSpec((tn, tc), lambda i, j: (i, j)),   # logits tile
                pl.BlockSpec((tn, 1), lambda i, j: (i, 0)),    # targets column
            ],
            out_specs=pl.BlockSpec((tn, 1), lambda i, j: (i, 0)),
            scratch_shapes=[
                pltpu.VMEM((tn, 1), jnp.float32),   # running max  m
                pltpu.VMEM((tn, 1), jnp.float32),   # running sum  l
                pltpu.VMEM((tn, 1), jnp.float32),   # target logit t
            ],
        ),
        compiler_params=pltpu.CompilerParams(
            dimension_semantics=("parallel", "arbitrary"),
            vmem_limit_bytes=vmem_limit_bytes,
        ),
        cost_estimate=cost,
    )(logits, targets_2d)

    # Edge rows (>= N) were written as exactly 0 in-kernel; the per-row NLL
    # writeback is only N*4 bytes, so the final mean is done in plain JAX.
    return jnp.sum(per_row_nll) / jnp.float32(n)


if __name__ == "__main__":
    key = jax.random.PRNGKey(0)
    k_logits, k_targets = jax.random.split(key)

    # Small shapes chosen (with small explicit tiles) to exercise row tiling,
    # class tiling, the class-remainder mask and the edge-row mask.
    N, C = 50, 200
    logits = jax.random.normal(k_logits, (N, C), dtype=jnp.float32)
    targets = jax.random.randint(k_targets, (N,), 0, C, dtype=jnp.int32)

    def ref_loss(lg):
        lp = jax.nn.log_softmax(lg.astype(jnp.float32), axis=-1)
        return -jnp.mean(lp[jnp.arange(N), targets])

    # 1) Small explicit tiles: 50 % 16 != 0 and 200 % 128 != 0 -> both masks hit.
    loss_small = softmax_loss_second_part(logits, targets, tile_n=16, tile_c=128)
    # 2) Auto tiles: single class tile (C <= tile_c), >= 2 row tiles.
    loss_auto = softmax_loss_second_part(logits, targets)
    jax.block_until_ready((loss_small, loss_auto))

    ref = ref_loss(logits)
    assert jnp.allclose(loss_small, ref, atol=1e-4, rtol=1e-4), (loss_small, ref)
    assert jnp.allclose(loss_auto, ref, atol=1e-4, rtol=1e-4), (loss_auto, ref)

    # 3) bf16 logits (the HBM-traffic-halving path); reference uses the same
    #    bf16-rounded values.
    logits_bf16 = logits.astype(jnp.bfloat16)
    loss_bf16 = softmax_loss_second_part(logits_bf16, targets, tile_n=16, tile_c=128)
    jax.block_until_ready(loss_bf16)
    ref_bf16 = ref_loss(logits_bf16)
    assert jnp.allclose(loss_bf16, ref_bf16, atol=1e-2, rtol=1e-2), (loss_bf16, ref_bf16)

    print("KERNEL_OK")
</pallas_src>

<mosaic_0001>
module attributes {stable_mosaic.version = 11 : i64} {
  func.func @_ce_kernel(%arg0: i32, %arg1: i32, %arg2: memref<16x128xf32, #tpu.memory_space<vmem>>, %arg3: memref<16x1xi32, #tpu.memory_space<vmem>>, %arg4: memref<16x1xf32, #tpu.memory_space<vmem>>, %arg5: memref<16x1xf32, #tpu.memory_space<vmem>>, %arg6: memref<16x1xf32, #tpu.memory_space<vmem>>, %arg7: memref<16x1xf32, #tpu.memory_space<vmem>>) attributes {dimension_semantics = [#tpu.dimension_semantics<parallel>, #tpu.dimension_semantics<arbitrary>], iteration_bounds = array<i64: 4, 2>, scalar_prefetch = 0 : i64, scratch_operands = 3 : i64, tpu.core_type = #tpu.core_type<tc>, window_params = [{transform_indices = @transform_0, window_bounds = array<i64: 16, 128>}, {transform_indices = @transform_1, window_bounds = array<i64: 16, 1>}, {transform_indices = @transform_2, window_bounds = array<i64: 16, 1>}]} {
    %c0_i32 = arith.constant 0 : i32
    %0 = arith.cmpi eq, %arg1, %c0_i32 : i32
    %1 = arith.extui %0 : i1 to i32
    %c0_i32_0 = arith.constant 0 : i32
    %2 = arith.cmpi ne, %1, %c0_i32_0 : i32
    scf.if %2 {
      %cst = arith.constant 0xFF800000 : f32
      %12 = vector.broadcast %cst : f32 to vector<16x1xf32>
      %c0 = arith.constant 0 : index
      %c0_6 = arith.constant 0 : index
      %13 = vector.load %arg5[%c0, %c0_6] : memref<16x1xf32, #tpu.memory_space<vmem>>, vector<16x1xf32>
      tpu.vector_store %arg5[%c0, %c0_6], %12 {strides = array<i32>} : memref<16x1xf32, #tpu.memory_space<vmem>>, vector<16x1xf32>,
      %cst_7 = arith.constant 0.000000e+00 : f32
      %14 = vector.broadcast %cst_7 : f32 to vector<16x1xf32>
      %c0_8 = arith.constant 0 : index
      %c0_9 = arith.constant 0 : index
      %15 = vector.load %arg6[%c0_8, %c0_9] : memref<16x1xf32, #tpu.memory_space<vmem>>, vector<16x1xf32>
      tpu.vector_store %arg6[%c0_8, %c0_9], %14 {strides = array<i32>} : memref<16x1xf32, #tpu.memory_space<vmem>>, vector<16x1xf32>,
      %cst_10 = arith.constant 0.000000e+00 : f32
      %16 = vector.broadcast %cst_10 : f32 to vector<16x1xf32>
      %c0_11 = arith.constant 0 : index
      %c0_12 = arith.constant 0 : index
      %17 = vector.load %arg7[%c0_11, %c0_12] : memref<16x1xf32, #tpu.memory_space<vmem>>, vector<16x1xf32>
      tpu.vector_store %arg7[%c0_11, %c0_12], %16 {strides = array<i32>} : memref<16x1xf32, #tpu.memory_space<vmem>>, vector<16x1xf32>,
    } else {
    }
    %c1_i32 = arith.constant 1 : i32
    %3 = arith.cmpi eq, %arg1, %c1_i32 : i32
    %4 = arith.extui %3 : i1 to i32
    %c0_i32_1 = arith.constant 0 : i32
    %5 = arith.cmpi ne, %4, %c0_i32_1 : i32
    scf.if %5 {
      %c0 = arith.constant 0 : index
      %c0_6 = arith.constant 0 : index
      %12 = vector.load %arg2[%c0, %c0_6] : memref<16x128xf32, #tpu.memory_space<vmem>>, vector<16x128xf32>
      %13 = tpu.iota {dimensions = array<i32: 1>} : vector<16x128xi32>
      %c72_i32 = arith.constant 72 : i32
      %14 = vector.broadcast %c72_i32 : i32 to vector<16x128xi32>
      %15 = arith.cmpi slt, %13, %14 : vector<16x128xi32>
      %cst = arith.constant -3.40282347E+38 : f32
      %16 = vector.broadcast %cst : f32 to vector<16x128xf32>
      %17 = arith.select %15, %12, %16 : vector<16x128xi1>, vector<16x128xf32>
      %c0_7 = arith.constant 0 : index
      %c0_8 = arith.constant 0 : index
      %18 = vector.load %arg3[%c0_7, %c0_8] : memref<16x1xi32, #tpu.memory_space<vmem>>, vector<16x1xi32>
      %c128_i32 = arith.constant 128 : i32
      %19 = arith.muli %arg1, %c128_i32 : i32
      %20 = vector.broadcast %19 : i32 to vector<16x1xi32>
      %21 = arith.subi %18, %20 : vector<16x1xi32>
      %22 = vector.broadcast %21 : vector<16x1xi32> to vector<16x128xi32>
      %23 = arith.cmpi eq, %13, %22 : vector<16x128xi32>
      %c0_i32_9 = arith.constant 0 : i32
      %24 = arith.sitofp %c0_i32_9 : i32 to f32
      %25 = vector.broadcast %24 : f32 to vector<16x128xf32>
      %26 = arith.select %23, %17, %25 : vector<16x128xi1>, vector<16x128xf32>
      %c0_10 = arith.constant 0 : index
      %c0_11 = arith.constant 0 : index
      %27 = vector.load %arg7[%c0_10, %c0_11] : memref<16x1xf32, #tpu.memory_space<vmem>>, vector<16x1xf32>
      %cst_12 = arith.constant dense<0.000000e+00> : vector<16xf32>
      %28 = vector.multi_reduction <add>, %26, %cst_12 [1] : vector<16x128xf32> to vector<16xf32>
      %29 = vector.shape_cast %28 : vector<16xf32> to vector<16x1xf32>
      %30 = arith.addf %27, %29 : vector<16x1xf32>
      %c0_13 = arith.constant 0 : index
      %c0_14 = arith.constant 0 : index
      %31 = vector.load %arg7[%c0_13, %c0_14] : memref<16x1xf32, #tpu.memory_space<vmem>>, vector<16x1xf32>
      tpu.vector_store %arg7[%c0_13, %c0_14], %30 {strides = array<i32>} : memref<16x1xf32, #tpu.memory_space<vmem>>, vector<16x1xf32>,
      %c0_15 = arith.constant 0 : index
      %c0_16 = arith.constant 0 : index
      %32 = vector.load %arg5[%c0_15, %c0_16] : memref<16x1xf32, #tpu.memory_space<vmem>>, vector<16x1xf32>
      %cst_17 = arith.constant dense<0xFF800000> : vector<16xf32>
      %33 = vector.multi_reduction <maximumf>, %17, %cst_17 [1] : vector<16x128xf32> to vector<16xf32>
      %34 = vector.shape_cast %33 : vector<16xf32> to vector<16x1xf32>
      %35 = arith.maximumf %32, %34 : vector<16x1xf32>
      %36 = vector.broadcast %35 : vector<16x1xf32> to vector<16x128xf32>
      %37 = arith.subf %17, %36 : vector<16x128xf32>
      %38 = math.exp %37 : vector<16x128xf32>
      %c0_18 = arith.constant 0 : index
      %c0_19 = arith.constant 0 : index
      %39 = vector.load %arg6[%c0_18, %c0_19] : memref<16x1xf32, #tpu.memory_space<vmem>>, vector<16x1xf32>
      %40 = arith.subf %32, %35 : vector<16x1xf32>
      %41 = math.exp %40 : vector<16x1xf32>
      %42 = arith.mulf %39, %41 : vector<16x1xf32>
      %cst_20 = arith.constant dense<0.000000e+00> : vector<16xf32>
      %43 = vector.multi_reduction <add>, %38, %cst_20 [1] : vector<16x128xf32> to vector<16xf32>
      %44 = vector.shape_cast %43 : vector<16xf32> to vector<16x1xf32>
      %45 = arith.addf %42, %44 : vector<16x1xf32>
      %c0_21 = arith.constant 0 : index
      %c0_22 = arith.constant 0 : index
      %46 = vector.load %arg6[%c0_21, %c0_22] : memref<16x1xf32, #tpu.memory_space<vmem>>, vector<16x1xf32>
      tpu.vector_store %arg6[%c0_21, %c0_22], %45 {strides = array<i32>} : memref<16x1xf32, #tpu.memory_space<vmem>>, vector<16x1xf32>,
      %c0_23 = arith.constant 0 : index
      %c0_24 = arith.constant 0 : index
      %47 = vector.load %arg5[%c0_23, %c0_24] : memref<16x1xf32, #tpu.memory_space<vmem>>, vector<16x1xf32>
      tpu.vector_store %arg5[%c0_23, %c0_24], %35 {strides = array<i32>} : memref<16x1xf32, #tpu.memory_space<vmem>>, vector<16x1xf32>,
    } else {
    }
    %c1_i32_2 = arith.constant 1 : i32
    %6 = arith.cmpi ne, %arg1, %c1_i32_2 : i32
    %7 = arith.extui %6 : i1 to i32
    %c0_i32_3 = arith.constant 0 : i32
    %8 = arith.cmpi ne, %7, %c0_i32_3 : i32
    scf.if %8 {
      %c0 = arith.constant 0 : index
      %c0_6 = arith.constant 0 : index
      %12 = vector.load %arg2[%c0, %c0_6] : memref<16x128xf32, #tpu.memory_space<vmem>>, vector<16x128xf32>
      %13 = tpu.iota {dimensions = array<i32: 1>} : vector<16x128xi32>
      %c0_7 = arith.constant 0 : index
      %c0_8 = arith.constant 0 : index
      %14 = vector.load %arg3[%c0_7, %c0_8] : memref<16x1xi32, #tpu.memory_space<vmem>>, vector<16x1xi32>
      %c128_i32 = arith.constant 128 : i32
      %15 = arith.muli %arg1, %c128_i32 : i32
      %16 = vector.broadcast %15 : i32 to vector<16x1xi32>
      %17 = arith.subi %14, %16 : vector<16x1xi32>
      %18 = vector.broadcast %17 : vector<16x1xi32> to vector<16x128xi32>
      %19 = arith.cmpi eq, %13, %18 : vector<16x128xi32>
      %c0_i32_9 = arith.constant 0 : i32
      %20 = arith.sitofp %c0_i32_9 : i32 to f32
      %21 = vector.broadcast %20 : f32 to vector<16x128xf32>
      %22 = arith.select %19, %12, %21 : vector<16x128xi1>, vector<16x128xf32>
      %c0_10 = arith.constant 0 : index
      %c0_11 = arith.constant 0 : index
      %23 = vector.load %arg7[%c0_10, %c0_11] : memref<16x1xf32, #tpu.memory_space<vmem>>, vector<16x1xf32>
      %cst = arith.constant dense<0.000000e+00> : vector<16xf32>
      %24 = vector.multi_reduction <add>, %22, %cst [1] : vector<16x128xf32> to vector<16xf32>
      %25 = vector.shape_cast %24 : vector<16xf32> to vector<16x1xf32>
      %26 = arith.addf %23, %25 : vector<16x1xf32>
      %c0_12 = arith.constant 0 : index
      %c0_13 = arith.constant 0 : index
      %27 = vector.load %arg7[%c0_12, %c0_13] : memref<16x1xf32, #tpu.memory_space<vmem>>, vector<16x1xf32>
      tpu.vector_store %arg7[%c0_12, %c0_13], %26 {strides = array<i32>} : memref<16x1xf32, #tpu.memory_space<vmem>>, vector<16x1xf32>,
      %c0_14 = arith.constant 0 : index
      %c0_15 = arith.constant 0 : index
      %28 = vector.load %arg5[%c0_14, %c0_15] : memref<16x1xf32, #tpu.memory_space<vmem>>, vector<16x1xf32>
      %cst_16 = arith.constant dense<0xFF800000> : vector<16xf32>
      %29 = vector.multi_reduction <maximumf>, %12, %cst_16 [1] : vector<16x128xf32> to vector<16xf32>
      %30 = vector.shape_cast %29 : vector<16xf32> to vector<16x1xf32>
      %31 = arith.maximumf %28, %30 : vector<16x1xf32>
      %32 = vector.broadcast %31 : vector<16x1xf32> to vector<16x128xf32>
      %33 = arith.subf %12, %32 : vector<16x128xf32>
      %34 = math.exp %33 : vector<16x128xf32>
      %c0_17 = arith.constant 0 : index
      %c0_18 = arith.constant 0 : index
      %35 = vector.load %arg6[%c0_17, %c0_18] : memref<16x1xf32, #tpu.memory_space<vmem>>, vector<16x1xf32>
      %36 = arith.subf %28, %31 : vector<16x1xf32>
      %37 = math.exp %36 : vector<16x1xf32>
      %38 = arith.mulf %35, %37 : vector<16x1xf32>
      %cst_19 = arith.constant dense<0.000000e+00> : vector<16xf32>
      %39 = vector.multi_reduction <add>, %34, %cst_19 [1] : vector<16x128xf32> to vector<16xf32>
      %40 = vector.shape_cast %39 : vector<16xf32> to vector<16x1xf32>
      %41 = arith.addf %38, %40 : vector<16x1xf32>
      %c0_20 = arith.constant 0 : index
      %c0_21 = arith.constant 0 : index
      %42 = vector.load %arg6[%c0_20, %c0_21] : memref<16x1xf32, #tpu.memory_space<vmem>>, vector<16x1xf32>
      tpu.vector_store %arg6[%c0_20, %c0_21], %41 {strides = array<i32>} : memref<16x1xf32, #tpu.memory_space<vmem>>, vector<16x1xf32>,
      %c0_22 = arith.constant 0 : index
      %c0_23 = arith.constant 0 : index
      %43 = vector.load %arg5[%c0_22, %c0_23] : memref<16x1xf32, #tpu.memory_space<vmem>>, vector<16x1xf32>
      tpu.vector_store %arg5[%c0_22, %c0_23], %31 {strides = array<i32>} : memref<16x1xf32, #tpu.memory_space<vmem>>, vector<16x1xf32>,
    } else {
    }
    %c1_i32_4 = arith.constant 1 : i32
    %9 = arith.cmpi eq, %arg1, %c1_i32_4 : i32
    %10 = arith.extui %9 : i1 to i32
    %c0_i32_5 = arith.constant 0 : i32
    %11 = arith.cmpi ne, %10, %c0_i32_5 : i32
    scf.if %11 {
      %c0 = arith.constant 0 : index
      %c0_6 = arith.constant 0 : index
      %12 = vector.load %arg5[%c0, %c0_6] : memref<16x1xf32, #tpu.memory_space<vmem>>, vector<16x1xf32>
      %c0_7 = arith.constant 0 : index
      %c0_8 = arith.constant 0 : index
      %13 = vector.load %arg6[%c0_7, %c0_8] : memref<16x1xf32, #tpu.memory_space<vmem>>, vector<16x1xf32>
      %14 = math.log %13 : vector<16x1xf32>
      %15 = arith.addf %12, %14 : vector<16x1xf32>
      %c0_9 = arith.constant 0 : index
      %c0_10 = arith.constant 0 : index
      %16 = vector.load %arg7[%c0_9, %c0_10] : memref<16x1xf32, #tpu.memory_space<vmem>>, vector<16x1xf32>
      %17 = arith.subf %15, %16 : vector<16x1xf32>
      %18 = tpu.iota {dimensions = array<i32: 0>} : vector<16x1xi32>
      %c16_i32 = arith.constant 16 : i32
      %19 = arith.muli %arg0, %c16_i32 : i32
      %20 = vector.broadcast %19 : i32 to vector<16x1xi32>
      %21 = arith.addi %18, %20 : vector<16x1xi32>
      %c50_i32 = arith.constant 50 : i32
      %22 = vector.broadcast %c50_i32 : i32 to vector<16x1xi32>
      %23 = arith.cmpi slt, %21, %22 : vector<16x1xi32>
      %cst = arith.constant 0.000000e+00 : f32
      %24 = vector.broadcast %cst : f32 to vector<16x1xf32>
      %25 = arith.select %23, %17, %24 : vector<16x1xi1>, vector<16x1xf32>
      %c0_11 = arith.constant 0 : index
      %c0_12 = arith.constant 0 : index
      %26 = vector.load %arg4[%c0_11, %c0_12] : memref<16x1xf32, #tpu.memory_space<vmem>>, vector<16x1xf32>
      tpu.vector_store %arg4[%c0_11, %c0_12], %25 {strides = array<i32>} : memref<16x1xf32, #tpu.memory_space<vmem>>, vector<16x1xf32>,
    } else {
    }
    return
  }
  func.func @transform_0(%arg0: i32, %arg1: i32) -> (i32, i32) {
    %c0_i32 = arith.constant 0 : i32
    return %arg0, %arg1 : i32, i32
  }
  func.func @transform_1(%arg0: i32, %arg1: i32) -> (i32, i32) {
    %c0_i32 = arith.constant 0 : i32
    %c0_i32_0 = arith.constant 0 : i32
    return %arg0, %c0_i32 : i32, i32
  }
  func.func @transform_2(%arg0: i32, %arg1: i32) -> (i32, i32) {
    %c0_i32 = arith.constant 0 : i32
    %c0_i32_0 = arith.constant 0 : i32
    return %arg0, %c0_i32 : i32, i32
  }
}

</mosaic_0001>

<llo_original>
// kernel: tpu_custom_call.1
$region0: #{tpu_custom_call.1}
  #allocation0 [shape = 'u32[]', space=smem, size = 0x4, offset = 0x4, fixed_abs, tag = 'smem constant byte address 0x4 - core index']
  #allocation1 [shape = 'u32[144,128]{1,0:T(1,128)}', space=vmem, size = 0x12000, scoped, tag = 'internal scratch']
  #allocation2 [shape = 'f32[16,1]{1,0:T(8,128)}', space=vmem, size = 0x2000, scoped, tag = 'scratch operand']
  #allocation3 [shape = 'f32[16,1]{1,0:T(8,128)}', space=vmem, size = 0x2000, scoped, tag = 'scratch operand']
  #allocation4 [shape = 'f32[16,1]{1,0:T(8,128)}', space=vmem, size = 0x2000, scoped, tag = 'scratch operand']
  %s0 = inlined_call_operand.hbm [shape: f32[50,200], index: 0, kind: input, shape index: {}]
  %s1 = inlined_call_operand.hbm [shape: s32[50,1], index: 1, kind: input, shape index: {}]
  %s2 = inlined_call_operand.hbm [shape: f32[64,1], index: 2, kind: output, shape index: {}]
  %s3 = sld [smem:[#allocation0]]
  $region65: #{tpu_custom_call.1} parent=0
    _
  %s5 = ssub.s32 1, %s3
  %s6 = scalar_select 0, %s5, %s3
  $region1: #{tpu_custom_call.1} parent=0
    #allocation5 [shape = 'u8[16384]{0}', space=vmem, size = 0x4000, scoped, tag = 'input window, operand 0']
    #allocation6 [shape = 's32[2]{0}', space=sflag, size = 0x8, scoped, tag = 'scoped memory for tpu_custom_call.1']
    #allocation7 [shape = 's32[2]{0}', space=sflag, size = 0x8, scoped, tag = 'scoped memory for tpu_custom_call.1']
    #allocation8 [shape = 'u8[16384]{0}', space=vmem, size = 0x4000, scoped, tag = 'input window, operand 1']
    #allocation9 [shape = 's32[2]{0}', space=sflag, size = 0x8, scoped, tag = 'scoped memory for tpu_custom_call.1']
    #allocation10 [shape = 'u8[16384]{0}', space=vmem, size = 0x4000, scoped, tag = 'output window, operand 0']
    %7 = vsyncpa [#allocation6], 0
    %s8 = scalar_lea.sflag [#allocation6], 1
    %9 = vsyncpa %s8, 0
    %10 = vsyncpa [#allocation9], 0
    %s11 = scalar_lea.sflag [#allocation9], 1
    %12 = vsyncpa %s11, 0
    %13 = vsyncpa [#allocation7], 0
    %s14 = scalar_lea.sflag [#allocation7], 1
    %15 = vsyncpa %s14, 0
    loop: start=0, step=1, limit=10
    $region2: #{tpu_custom_call.1} parent=1 // loop_pre_header
      _
    $region3: #{tpu_custom_call.1} parent=1 // loop_header
      %s17 = sphi 0, %s21
      %p18 = scmp.ge.s32.totalorder %s17, 10
      %s24 = sphi 0, %s36
      %s25 = sphi 0, %s32
      %s26 = sphi 0, %s24
      %s27 = sphi 0, %s25
      %s28 = sphi 0, %s26
      %s29 = sphi 0, %s27
      %s41 = sphi 0, %s43
      %s44 = sphi 0, %s41
      %s45 = sphi 0, %s44
      %s61 = sphi 0, %s45
      %s67 = sphi 0, %s69
      %s70 = sphi 0, %s67
      %s71 = sphi 0, %s70
      %s87 = sphi 0, %s71
      %s93 = sphi 0, %s95
      %s96 = sphi 0, %s93
      %s97 = sphi 0, %s96
      %s113 = sphi 0, %s97
    $region4: #{tpu_custom_call.1} parent=1 // loop_header_branch
      %20 = sbr.rel (%p18) target = $region8
    $region5: #{tpu_custom_call.1} parent=1 // loop_body
      %s22 = ssub.s32 %s17, 1
      %s23 = ssub.s32 %s17, 2
      %s30 = sadd.s32 1, %s25
      %p31 = scmp.ge.s32.totalorder %s30, 2
      %s32 = scalar_select %p31, 0, %s30
      %s33 = sadd.s32 1, %s24
      %s34 = scalar_select %p31, %s33, %s24
      %p35 = scmp.ge.s32.totalorder %s34, 4
      %s36 = scalar_select %p35, 0, %s34
      %s37 = ssub.s32 %s24, %s36
      %s38 = ssub.s32 %s25, %s32
      %s39 = sor.u32 %s37, %s38
      %p40 = scmp.eq.s32.totalorder %s39, 0
      %s42 = sadd.s32 %s41, 1
      %s43 = scalar_select %p40, %s41, %s42
      %p46 = pneg %p40
      %p47 = scmp.eq.s32.totalorder %s17, 7
      %p48 = por %p46, %p47
      %p49 = scmp.ne.s32.totalorder %s41, %s44
      %p50 = scmp.eq.s32.totalorder %s17, 0
      %p51 = por %p49, %p50
      %p52 = scmp.ne.s32.totalorder %s41, %s44
      %p53 = scmp.eq.s32.totalorder %s22, 7
      %p54 = por %p52, %p53
      %p55 = scmp.ne.s32.totalorder %s44, %s45
      %p56 = scmp.eq.s32.totalorder %s22, 0
      %p57 = por %p55, %p56
      %p58 = scmp.ne.s32.totalorder %s44, %s45
      %p59 = scmp.eq.s32.totalorder %s23, 7
      %p60 = por %p58, %p59
      %p62 = scmp.ne.s32.totalorder %s45, %s61
      %p63 = scmp.eq.s32.totalorder %s23, 0
      %p64 = por %p62, %p63
      %s65 = ssub.s32 %s24, %s36
      %p66 = scmp.eq.s32.totalorder %s65, 0
      %s68 = sadd.s32 %s67, 1
      %s69 = scalar_select %p66, %s67, %s68
      %p72 = pneg %p66
      %p73 = scmp.eq.s32.totalorder %s17, 7
      %p74 = por %p72, %p73
      %p75 = scmp.ne.s32.totalorder %s67, %s70
      %p76 = scmp.eq.s32.totalorder %s17, 0
      %p77 = por %p75, %p76
      %p78 = scmp.ne.s32.totalorder %s67, %s70
      %p79 = scmp.eq.s32.totalorder %s22, 7
      %p80 = por %p78, %p79
      %p81 = scmp.ne.s32.totalorder %s70, %s71
      %p82 = scmp.eq.s32.totalorder %s22, 0
      %p83 = por %p81, %p82
      %p84 = scmp.ne.s32.totalorder %s70, %s71
      %p85 = scmp.eq.s32.totalorder %s23, 7
      %p86 = por %p84, %p85
      %p88 = scmp.ne.s32.totalorder %s71, %s87
      %p89 = scmp.eq.s32.totalorder %s23, 0
      %p90 = por %p88, %p89
      %s91 = ssub.s32 %s24, %s36
      %p92 = scmp.eq.s32.totalorder %s91, 0
      %s94 = sadd.s32 %s93, 1
      %s95 = scalar_select %p92, %s93, %s94
      %p98 = pneg %p92
      %p99 = scmp.eq.s32.totalorder %s17, 7
      %p100 = por %p98, %p99
      %p101 = scmp.ne.s32.totalorder %s93, %s96
      %p102 = scmp.eq.s32.totalorder %s17, 0
      %p103 = por %p101, %p102
      %p104 = scmp.ne.s32.totalorder %s93, %s96
      %p105 = scmp.eq.s32.totalorder %s22, 7
      %p106 = por %p104, %p105
      %p107 = scmp.ne.s32.totalorder %s96, %s97
      %p108 = scmp.eq.s32.totalorder %s22, 0
      %p109 = por %p107, %p108
      %p110 = scmp.ne.s32.totalorder %s96, %s97
      %p111 = scmp.eq.s32.totalorder %s23, 7
      %p112 = por %p110, %p111
      %p114 = scmp.ne.s32.totalorder %s97, %s113
      %p115 = scmp.eq.s32.totalorder %s23, 0
      %p116 = por %p114, %p115
      %p117 = scmp.le.s32.totalorder 1, %s17
      %p118 = scmp.lt.s32.totalorder %s17, 9
      %p119 = pnand %p117, %p118
      %p120 = pneg %p119
      // Predicated region
      $region9: #{tpu_custom_call.1} parent=5 // pred_check
        _
      $region10: #{tpu_custom_call.1} parent=5 // pred_check_branch
        %122 = sbr.rel (%p119) target = $region12
      $region11: #{tpu_custom_call.1} parent=5 // pred_region
        %s123 = ssub.s32 %s17, 1
      $region12: #{tpu_custom_call.1} parent=5 // pred_fallthru
        _
      %p124 = scmp.lt.s32.totalorder %s17, 8
      // Predicated region
      $region13: #{tpu_custom_call.1} parent=5 // pred_check
        %p125 = pneg %p124
      $region14: #{tpu_custom_call.1} parent=5 // pred_check_branch
        %127 = sbr.rel (%p125) target = $region16
      $region15: #{tpu_custom_call.1} parent=5 // pred_region
        // Predicated region
        $region17: #{tpu_custom_call.1} parent=15 // pred_check
          %p128 = pneg %p51
        $region18: #{tpu_custom_call.1} parent=15 // pred_check_branch
          %130 = sbr.rel (%p128) target = $region20
        $region19: #{tpu_custom_call.1} parent=15 // pred_region
          %s131 = sand.u32 %s41, 1
          %s132 = scalar_lea.sflag [#allocation6], %s131
          %s133 = sand.u32 %s41, 1
          %s134 = smul.addr %s133, 16
          %s135 = scalar_lea.vmem [#allocation5], %s134
          %s136 = smul.u32 2, %s24
          %s137 = ssub.s32 7, %s136
          %p138 = scmp.lt.s32.totalorder %s137, 2
          %s139 = scalar_select %p138, %s137, 2
          %s140 = smul.u32 128, %s139
          %s142 = ssub.s32 256, %s140
          %143 = vsyncadd %s132, %s142
          %p144 = scmp.ne.s32.totalorder 0, %s140
          %s145 = smul.addr %s136, 2
          %s146 = sadd.s32 %s25, %s145
          %s147 = smul.addr %s146, 128
          %s148 = scalar_lea.hbm %s0, %s147
          %s149 = smul.u32 8, %s139
          %s150 = sshll.u32 %s135, 4
          %s151 = int_to_ptr.vmem [resolvable:$true] %s150
          %s152 = sshll.u32 %s149, 4
          %156 = dma.hbm_to_vmem [thread:$0]  (%p144), %s148, %s152, %s151, %s132, 256, 128, 8
        $region20: #{tpu_custom_call.1} parent=15 // pred_fallthru
          _
        // Predicated region
        $region21: #{tpu_custom_call.1} parent=15 // pred_check
          %p157 = pneg %p77
        $region22: #{tpu_custom_call.1} parent=15 // pred_check_branch
          %159 = sbr.rel (%p157) target = $region24
        $region23: #{tpu_custom_call.1} parent=15 // pred_region
          %s160 = sand.u32 %s67, 1
          %s161 = scalar_lea.sflag [#allocation9], %s160
          %s162 = sand.u32 %s67, 1
          %s163 = smul.addr %s162, 16
          %s164 = scalar_lea.vmem [#allocation8], %s163
          %s165 = smul.u32 2, %s24
          %s166 = ssub.s32 7, %s165
          %p167 = scmp.lt.s32.totalorder %s166, 2
          %s168 = scalar_select %p167, %s166, 2
          %s169 = smul.u32 128, %s168
          %s171 = ssub.s32 256, %s169
          %172 = vsyncadd %s161, %s171
          %p173 = scmp.ne.s32.totalorder 0, %s169
          %s174 = smul.addr %s165, 128
          %s175 = scalar_lea.hbm %s1, %s174
          %s176 = smul.u32 8, %s168
          %s177 = sshll.u32 %s164, 4
          %s178 = int_to_ptr.vmem [resolvable:$true] %s177
          %s179 = sshll.u32 %s176, 4
          %183 = dma.hbm_to_vmem [thread:$0]  (%p173), %s175, %s179, %s178, %s161, 128, 128, 8
        $region24: #{tpu_custom_call.1} parent=15 // pred_fallthru
          _
      $region16: #{tpu_custom_call.1} parent=5 // pred_fallthru
        _
      %p184 = scmp.le.s32.totalorder 1, %s17
      %p185 = scmp.lt.s32.totalorder %s17, 9
      %p186 = pnand %p184, %p185
      %p187 = pneg %p186
      // Predicated region
      $region25: #{tpu_custom_call.1} parent=5 // pred_check
        _
      $region26: #{tpu_custom_call.1} parent=5 // pred_check_branch
        %189 = sbr.rel (%p186) target = $region28
      $region27: #{tpu_custom_call.1} parent=5 // pred_region
        %s190 = ssub.s32 %s17, 1
        %s191 = sand.u32 %s44, 1
        %s192 = scalar_lea.sflag [#allocation6], %s191
        %s193 = sand.u32 %s44, 1
        %s194 = smul.addr %s193, 16
        %s195 = scalar_lea.vmem [#allocation5], %s194
        // Predicated region
        $region29: #{tpu_custom_call.1} parent=27 // pred_check
          %p196 = pneg %p57
        $region30: #{tpu_custom_call.1} parent=27 // pred_check_branch
          %198 = sbr.rel (%p196) target = $region32
        $region31: #{tpu_custom_call.1} parent=27 // pred_region
          %199 = dma.done %s192, 256
        $region32: #{tpu_custom_call.1} parent=27 // pred_fallthru
          _
        %s200 = sand.u32 %s70, 1
        %s201 = scalar_lea.sflag [#allocation9], %s200
        %s202 = sand.u32 %s70, 1
        %s203 = smul.addr %s202, 16
        %s204 = scalar_lea.vmem [#allocation8], %s203
        // Predicated region
        $region33: #{tpu_custom_call.1} parent=27 // pred_check
          %p205 = pneg %p83
        $region34: #{tpu_custom_call.1} parent=27 // pred_check_branch
          %207 = sbr.rel (%p205) target = $region36
        $region35: #{tpu_custom_call.1} parent=27 // pred_region
          %208 = dma.done %s201, 256
        $region36: #{tpu_custom_call.1} parent=27 // pred_fallthru
          _
        %s209 = sand.u32 %s44, 1
        %s210 = scalar_lea.sflag [#allocation6], %s209
        %s211 = sand.u32 %s44, 1
        %s212 = smul.addr %s211, 16
        %s213 = scalar_lea.vmem [#allocation5], %s212
        %p214 = pneg %p57
        %p215 = pneg %p54
        %s216 = sand.u32 %s70, 1
        %s217 = scalar_lea.sflag [#allocation9], %s216
        %s218 = sand.u32 %s70, 1
        %s219 = smul.addr %s218, 16
        %s220 = scalar_lea.vmem [#allocation8], %s219
        %p221 = pneg %p83
        %p222 = pneg %p80
        %p223 = pneg %p109
        %p224 = pneg %p106
        %s225 = sand.u32 %s96, 1
        %s226 = scalar_lea.sflag [#allocation7], %s225
        %s227 = sand.u32 %s96, 1
        %s228 = smul.addr %s227, 16
        %s229 = scalar_lea.vmem [#allocation10], %s228
        %s230 = smul.u32 2, %s26
        %s231 = ssub.s32 7, %s230
        %p232 = scmp.lt.s32.totalorder %s231, 2
        %s233 = scalar_select %p232, %s231, 2
        %s234 = smul.u32 128, %s233
        %s235 = smul.u32 2, %s26
        %s236 = ssub.s32 7, %s235
        %p237 = scmp.lt.s32.totalorder %s236, 2
        %s238 = scalar_select %p237, %s236, 2
        %s239 = smul.u32 128, %s238
        %s240 = smul.u32 2, %s26
        %p241 = scmp.eq.s32.totalorder %s27, 0
        // Predicated region
        $region37: #{tpu_custom_call.1} parent=27 // pred_check
          %p242 = pneg %p241
        $region38: #{tpu_custom_call.1} parent=27 // pred_check_branch
          %244 = sbr.rel (%p242) target = $region40
        $region39: #{tpu_custom_call.1} parent=27 // pred_region
          %vm245 = vcmask 7168
          %246 = vst.msk [vmem:[#allocation2] sm:$0xff] %vm245, -inf
          %247 = vst.msk [vmem:[#allocation2 + $0x8] sm:$0xff] %vm245, -inf
          %248 = vst.msk [vmem:[#allocation3] sm:$0xff] %vm245, 0.0
          %249 = vst.msk [vmem:[#allocation3 + $0x8] sm:$0xff] %vm245, 0.0
          %250 = vst.msk [vmem:[#allocation4] sm:$0xff] %vm245, 0.0
          %251 = vst.msk [vmem:[#allocation4 + $0x8] sm:$0xff] %vm245, 0.0
        $region40: #{tpu_custom_call.1} parent=27 // pred_fallthru
          _
        %p252 = scmp.eq.s32.totalorder %s27, 1
        // Predicated region
        $region41: #{tpu_custom_call.1} parent=27 // pred_check
          %p253 = pneg %p252
        $region42: #{tpu_custom_call.1} parent=27 // pred_check_branch
          %255 = sbr.rel (%p253) target = $region44
        $region43: #{tpu_custom_call.1} parent=27 // pred_region
          %v256 = vld [vmem:[%s195] sm:$0xff]
          %v257 = vld [vmem:[%s195 + $0x8] sm:$0xff]
          %v258 = vlaneseq
          %v259 = vand.u32 %v258, 127
          %vm260 = vcmp.lt.s32.totalorder %v259, 72
          %v261 = vsel %vm260, %v256, -3.4028235e+38
          %v262 = vsel %vm260, %v257, -3.4028235e+38
          %v263 = vld [vmem:[%s204] sm:$0xff]
          %v264 = vld [vmem:[%s204 + $0x8] sm:$0xff]
          %s265 = smul.u32 %s27, 128
          %v266 = vstv %s265
          %v267 = vsub.s32 %v263, %v266
          %v268 = vsub.s32 %v264, %v266
          %269 = vset.pattern.permute.xlu0 0
          %270 = vperm.xlu0 %269, %v267
          %v271 = vpop.permute.xlu0 %270
          %272 = vset.pattern.permute.xlu0 0
          %273 = vperm.xlu0 %272, %v268
          %v274 = vpop.permute.xlu0 %273
          %vm275 = vcmp.eq.s32.totalorder %v259, %v271
          %vm276 = vcmp.eq.s32.totalorder %v259, %v274
          %v277 = vsel %vm275, %v261, 0.0
          %v278 = vsel %vm276, %v262, 0.0
          %v279 = vld [vmem:[#allocation4] sm:$0xff]
          %v280 = vld [vmem:[#allocation4 + $0x8] sm:$0xff]
          %281 = vadd.xlane.f32.xlu0 %v277
          %v282 = vpop.xlane.xlu0 %281
          %283 = vadd.xlane.f32.xlu0 %v278
          %v284 = vpop.xlane.xlu0 %283
          %v285 = vadd.f32 %v279, %v282
          %v286 = vadd.f32 %v280, %v284
          %vm287 = vcmask 7168
          %288 = vst.msk [vmem:[#allocation4] sm:$0xff] %vm287, %v285
          %289 = vst.msk [vmem:[#allocation4 + $0x8] sm:$0xff] %vm287, %v286
          %v290 = vld [vmem:[#allocation2] sm:$0xff]
          %v291 = vld [vmem:[#allocation2 + $0x8] sm:$0xff]
          %292 = vmax.xlane.f32.xlu0 %v261
          %v293 = vpop.xlane.xlu0 %292
          %294 = vmax.xlane.f32.xlu0 %v262
          %v295 = vpop.xlane.xlu0 %294
          %v296 = vmax.f32 %v290, %v293
          %v297 = vmax.f32 %v291, %v295
          %299 = vset.pattern.permute.xlu0 0
          %300 = vperm.xlu0 %299, %v296
          %v301 = vpop.permute.xlu0 %300
          %304 = vset.pattern.permute.xlu0 0
          %305 = vperm.xlu0 %304, %v297
          %v306 = vpop.permute.xlu0 %305
          %v308 = vsub.f32 %v261, %v301
          %v309 = vsub.f32 %v262, %v306
          %v310 = vmul.f32 %v308, 1.442695
          %v311 = vpow.pop %v310
          %v312 = vmul.f32 %v309, 1.442695
          %v313 = vpow.pop %v312
          %v314 = vld [vmem:[#allocation3] sm:$0xff]
          %v315 = vld [vmem:[#allocation3 + $0x8] sm:$0xff]
          %v316 = vsub.f32 %v290, %v296
          %v317 = vsub.f32 %v291, %v297
          %v318 = vmul.f32 %v316, 1.442695
          %v319 = vpow.pop %v318
          %v320 = vmul.f32 %v317, 1.442695
          %v321 = vpow.pop %v320
          %v322 = vmul.f32 %v314, %v319
          %v323 = vmul.f32 %v315, %v321
          %324 = vadd.xlane.f32.xlu0 %v311
          %v325 = vpop.xlane.xlu0 %324
          %326 = vadd.xlane.f32.xlu0 %v313
          %v327 = vpop.xlane.xlu0 %326
          %v328 = vadd.f32 %v322, %v325
          %v329 = vadd.f32 %v323, %v327
          %330 = vst.msk [vmem:[#allocation3] sm:$0xff] %vm287, %v328
          %331 = vst.msk [vmem:[#allocation3 + $0x8] sm:$0xff] %vm287, %v329
          %332 = vst.msk [vmem:[#allocation2] sm:$0xff] %vm287, %v296
          %333 = vst.msk [vmem:[#allocation2 + $0x8] sm:$0xff] %vm287, %v297
        $region44: #{tpu_custom_call.1} parent=27 // pred_fallthru
          _
        %p334 = scmp.ne.s32.totalorder %s27, 1
        // Predicated region
        $region45: #{tpu_custom_call.1} parent=27 // pred_check
          %p335 = pneg %p334
        $region46: #{tpu_custom_call.1} parent=27 // pred_check_branch
          %337 = sbr.rel (%p335) target = $region48
        $region47: #{tpu_custom_call.1} parent=27 // pred_region
          %v338 = vld [vmem:[%s195] sm:$0xff]
          %v339 = vld [vmem:[%s195 + $0x8] sm:$0xff]
          %v340 = vlaneseq
          %v341 = vand.u32 %v340, 127
          %v342 = vld [vmem:[%s204] sm:$0xff]
          %v343 = vld [vmem:[%s204 + $0x8] sm:$0xff]
          %s344 = smul.u32 %s27, 128
          %v345 = vstv %s344
          %v346 = vsub.s32 %v342, %v345
          %v347 = vsub.s32 %v343, %v345
          %348 = vset.pattern.permute.xlu0 0
          %349 = vperm.xlu0 %348, %v346
          %v350 = vpop.permute.xlu0 %349
          %351 = vset.pattern.permute.xlu0 0
          %352 = vperm.xlu0 %351, %v347
          %v353 = vpop.permute.xlu0 %352
          %vm354 = vcmp.eq.s32.totalorder %v341, %v350
          %vm355 = vcmp.eq.s32.totalorder %v341, %v353
          %v356 = vsel %vm354, %v338, 0.0
          %v357 = vsel %vm355, %v339, 0.0
          %v358 = vld [vmem:[#allocation4] sm:$0xff]
          %v359 = vld [vmem:[#allocation4 + $0x8] sm:$0xff]
          %360 = vadd.xlane.f32.xlu0 %v356
          %v361 = vpop.xlane.xlu0 %360
          %362 = vadd.xlane.f32.xlu0 %v357
          %v363 = vpop.xlane.xlu0 %362
          %v364 = vadd.f32 %v358, %v361
          %v365 = vadd.f32 %v359, %v363
          %vm366 = vcmask 7168
          %367 = vst.msk [vmem:[#allocation4] sm:$0xff] %vm366, %v364
          %368 = vst.msk [vmem:[#allocation4 + $0x8] sm:$0xff] %vm366, %v365
          %v369 = vld [vmem:[#allocation2] sm:$0xff]
          %v370 = vld [vmem:[#allocation2 + $0x8] sm:$0xff]
          %371 = vmax.xlane.f32.xlu0 %v338
          %v372 = vpop.xlane.xlu0 %371
          %373 = vmax.xlane.f32.xlu0 %v339
          %v374 = vpop.xlane.xlu0 %373
          %v375 = vmax.f32 %v369, %v372
          %v376 = vmax.f32 %v370, %v374
          %378 = vset.pattern.permute.xlu0 0
          %379 = vperm.xlu0 %378, %v375
          %v380 = vpop.permute.xlu0 %379
          %383 = vset.pattern.permute.xlu0 0
          %384 = vperm.xlu0 %383, %v376
          %v385 = vpop.permute.xlu0 %384
          %v387 = vsub.f32 %v338, %v380
          %v388 = vsub.f32 %v339, %v385
          %v389 = vmul.f32 %v387, 1.442695
          %v390 = vpow.pop %v389
          %v391 = vmul.f32 %v388, 1.442695
          %v392 = vpow.pop %v391
          %v393 = vld [vmem:[#allocation3] sm:$0xff]
          %v394 = vld [vmem:[#allocation3 + $0x8] sm:$0xff]
          %v395 = vsub.f32 %v369, %v375
          %v396 = vsub.f32 %v370, %v376
          %v397 = vmul.f32 %v395, 1.442695
          %v398 = vpow.pop %v397
          %v399 = vmul.f32 %v396, 1.442695
          %v400 = vpow.pop %v399
          %v401 = vmul.f32 %v393, %v398
          %v402 = vmul.f32 %v394, %v400
          %403 = vadd.xlane.f32.xlu0 %v390
          %v404 = vpop.xlane.xlu0 %403
          %405 = vadd.xlane.f32.xlu0 %v392
          %v406 = vpop.xlane.xlu0 %405
          %v407 = vadd.f32 %v401, %v404
          %v408 = vadd.f32 %v402, %v406
          %409 = vst.msk [vmem:[#allocation3] sm:$0xff] %vm366, %v407
          %410 = vst.msk [vmem:[#allocation3 + $0x8] sm:$0xff] %vm366, %v408
          %411 = vst.msk [vmem:[#allocation2] sm:$0xff] %vm366, %v375
          %412 = vst.msk [vmem:[#allocation2 + $0x8] sm:$0xff] %vm366, %v376
        $region48: #{tpu_custom_call.1} parent=27 // pred_fallthru
          _
        // Predicated region
        $region49: #{tpu_custom_call.1} parent=27 // pred_check
          %p413 = pneg %p252
        $region50: #{tpu_custom_call.1} parent=27 // pred_check_branch
          %415 = sbr.rel (%p413) target = $region52
        $region51: #{tpu_custom_call.1} parent=27 // pred_region
          %v416 = vld [vmem:[#allocation2] sm:$0xff]
          %v417 = vld [vmem:[#allocation2 + $0x8] sm:$0xff]
          %v418 = vld [vmem:[#allocation3] sm:$0xff]
          %v419 = vld [vmem:[#allocation3 + $0x8] sm:$0xff]
          %v420 = vlog2.pop %v418
          %v421 = vmul.f32 %v420, 0.6931472
          %v422 = vlog2.pop %v419
          %v423 = vmul.f32 %v422, 0.6931472
          %v424 = vadd.f32 %v416, %v421
          %v425 = vadd.f32 %v417, %v423
          %v426 = vld [vmem:[#allocation4] sm:$0xff]
          %v427 = vld [vmem:[#allocation4 + $0x8] sm:$0xff]
          %v428 = vsub.f32 %v424, %v426
          %v429 = vsub.f32 %v425, %v427
          %v430 = vlaneseq
          %v431 = vshrl.u32 %v430, 7
          %v432 = vadd.s32 %v431, 8
          %s433 = smul.u32 %s26, 16
          %v434 = vstv %s433
          %v435 = vadd.s32 %v431, %v434
          %v436 = vadd.s32 %v432, %v434
          %vm437 = vcmp.lt.s32.totalorder %v435, 50
          %vm438 = vcmp.lt.s32.totalorder %v436, 50
          %v439 = vsel %vm437, %v428, 0.0
          %v440 = vsel %vm438, %v429, 0.0
          %vm441 = vcmask 7168
          %442 = vst.msk [vmem:[%s229] sm:$0xff] %vm441, %v439
          %443 = vst.msk [vmem:[%s229 + $0x8] sm:$0xff] %vm441, %v440
        $region52: #{tpu_custom_call.1} parent=27 // pred_fallthru
          _
        %s444 = sand.u32 %s96, 1
        %s445 = scalar_lea.sflag [#allocation7], %s444
        %s446 = sand.u32 %s96, 1
        %s447 = smul.addr %s446, 16
        %s448 = scalar_lea.vmem [#allocation10], %s447
        // Predicated region
        $region53: #{tpu_custom_call.1} parent=27 // pred_check
          %p449 = pneg %p106
        $region54: #{tpu_custom_call.1} parent=27 // pred_check_branch
          %451 = sbr.rel (%p449) target = $region56
        $region55: #{tpu_custom_call.1} parent=27 // pred_region
          %s452 = smul.u32 2, %s26
          %s454 = ssub.s32 256, 256
          %455 = vsyncadd %s445, %s454
          %s456 = smul.addr %s452, 128
          %s457 = scalar_lea.hbm %s2, %s456
          %s458 = sshll.u32 %s448, 4
          %s459 = int_to_ptr.vmem [resolvable:$true] %s458
          %464 = dma.vmem_to_hbm [thread:$0]  %s459, 256, %s457, %s445, 128, 128, 8
        $region56: #{tpu_custom_call.1} parent=27 // pred_fallthru
          _
      $region28: #{tpu_custom_call.1} parent=5 // pred_fallthru
        _
      %p465 = scmp.le.s32.totalorder 2, %s17
      // Predicated region
      $region57: #{tpu_custom_call.1} parent=5 // pred_check
        %p466 = pneg %p465
      $region58: #{tpu_custom_call.1} parent=5 // pred_check_branch
        %468 = sbr.rel (%p466) target = $region60
      $region59: #{tpu_custom_call.1} parent=5 // pred_region
        %s469 = ssub.s32 %s17, 2
        // Predicated region
        $region61: #{tpu_custom_call.1} parent=59 // pred_check
          %p470 = pneg %p112
        $region62: #{tpu_custom_call.1} parent=59 // pred_check_branch
          %472 = sbr.rel (%p470) target = $region64
        $region63: #{tpu_custom_call.1} parent=59 // pred_region
          %s473 = sand.u32 %s97, 1
          %s474 = scalar_lea.sflag [#allocation7], %s473
          %s475 = sand.u32 %s97, 1
          %s476 = smul.addr %s475, 16
          %s477 = scalar_lea.vmem [#allocation10], %s476
          %478 = dma.done %s474, 256
        $region64: #{tpu_custom_call.1} parent=59 // pred_fallthru
          _
      $region60: #{tpu_custom_call.1} parent=5 // pred_fallthru
        _
    $region6: #{tpu_custom_call.1} parent=1 // loop_footer
      %s21 = sadd.s32 1, %s17
    $region7: #{tpu_custom_call.1} parent=1 // loop_footer_branch
      %16 = sbr.rel target = $region3
    $region8: #{tpu_custom_call.1} parent=1 // loop_exit
      _
    %479 = vsyncpa [#allocation6], 1
    %s480 = scalar_lea.sflag [#allocation6], 1
    %481 = vsyncpa %s480, 1
    %482 = vsyncpa [#allocation9], 1
    %s483 = scalar_lea.sflag [#allocation9], 1
    %484 = vsyncpa %s483, 1
    %485 = vsyncpa [#allocation7], 1
    %s486 = scalar_lea.sflag [#allocation7], 1
    %487 = vsyncpa %s486, 1

</llo_original>
